<compile_context>
chip_gen: v5e
topology: v5e:2x2
jax: 0.10.0
libtpu: 0.0.40
codegen_flags: <defaults>
</compile_context>

<pallas_src>
import jax
import jax.numpy as jnp
from jax.experimental import pallas as pl
from jax.experimental.pallas import tpu as pltpu


def _round_up(x, m):
    return ((x + m - 1) // m) * m


def ensemble_kernel(x_ref, s_ref, o_ref):
    # x_ref: (TR, 128)  tile of flattened model outputs (batch-major, model-minor)
    # s_ref: (128, G)   block-diagonal weight matrix, S[M*b + m, b] = softmax(w)[m]
    # o_ref: (TR, G)    ensembled logits; row-major order == flat batch order
    o_ref[...] = jnp.dot(
        x_ref[...].astype(jnp.float32),
        s_ref[...],
        preferred_element_type=jnp.float32,
        precision=jax.lax.Precision.HIGHEST,   # full f32 accuracy on the MXU
    ).astype(o_ref.dtype)


def trainable_ensemble_forward(raw_weights, model_outputs, *, tr_max=8192):
    """raw_weights: (M,); model_outputs: (B, M) -> logits (B,) float32."""
    B, M = model_outputs.shape
    if M > 128:
        # TODO(synk): ensembles with >128 models would need a K-tiled reduction.
        raise NotImplementedError("num_models > 128 not supported")

    # ---- tiny, batch-independent prep (hoisted out of the kernel) -----------
    weights = jax.nn.softmax(raw_weights.astype(jnp.float32))            # (M,)

    # Pad the model axis to a power of two so M' divides 128 (no-op for the
    # common M = 2/4/8/... case; odd M costs one extra copy of the input).
    Mp = max(int(pl.next_power_of_2(M)), 1)
    if Mp != M:
        model_outputs = jnp.pad(model_outputs, ((0, 0), (0, Mp - M)))
        weights = jnp.pad(weights, (0, Mp - M))
    G = 128 // Mp                                    # batch elements per 128-lane row

    # Block-diagonal selection matrix S[Mp*b + m, b] = w[m]   (128, G) f32.
    lane = jnp.arange(128)
    S = jnp.where(
        (lane[:, None] // Mp) == jnp.arange(G)[None, :],
        weights[lane % Mp][:, None],
        jnp.float32(0.0),
    )

    # ---- free contiguous reshape to a lane-dense (Rp, 128) view -------------
    flat = model_outputs.reshape(-1)                                   # no copy
    Rp = _round_up(pl.cdiv(B * Mp, 128), 8)          # sublane-aligned row count
    pad = Rp * 128 - B * Mp
    if pad:                                          # <= 1023 elements, ~free
        flat = jnp.pad(flat, (0, pad))
    x = flat.reshape(Rp, 128)                                          # no copy

    # ---- tile sizing: big bandwidth-bound tiles, >=2 grid steps if possible -
    tr = min(tr_max, max(8, _round_up(pl.cdiv(Rp, 2), 8)))
    num_tiles = pl.cdiv(Rp, tr)                      # ragged last tile is fine:
                                                     # rows never mix, pad rows
                                                     # are sliced off below.

    itemsize = jnp.dtype(model_outputs.dtype).itemsize
    cost = pl.CostEstimate(
        flops=2 * Mp * B,
        transcendentals=0,
        bytes_accessed=B * Mp * itemsize + B * 4,
    )

    out = pl.pallas_call(
        ensemble_kernel,
        out_shape=jax.ShapeDtypeStruct((Rp, G), jnp.float32),
        grid=(num_tiles,),
        in_specs=[
            pl.BlockSpec((tr, 128), lambda i: (i, 0)),   # streamed input tile
            pl.BlockSpec((128, G), lambda i: (0, 0)),    # resident weight matrix
        ],
        out_specs=pl.BlockSpec((tr, G), lambda i: (i, 0)),
        compiler_params=pltpu.CompilerParams(
            dimension_semantics=("parallel",),           # megacore / v7x 2xTC
            # ~16 MiB of double-buffered blocks at tr=8192: equals the default
            # scoped limit on v6e/v7x, raises v5e's 16 MiB default, and leaves
            # headroom inside v7x's 64 MiB physical VMEM.
            vmem_limit_bytes=32 << 20,
        ),
        cost_estimate=cost,
    )(x, S)

    # (Rp, G) -> (Rp*G,) is a free contiguous reshape; drop pad batches.
    return out.reshape(-1)[:B]


if __name__ == "__main__":
    key = jax.random.PRNGKey(0)
    k_x, k_x2, k_x3, k_w = jax.random.split(key, 4)

    M = 4            # num_models (small ensemble)
    B = 1000         # ragged batch: B*M = 4000 -> tiny 96-element pad

    # Parameter init matches nn.Parameter(torch.ones(num_models)).
    raw_weights = jnp.ones((M,), dtype=jnp.float32)
    model_outputs = jax.random.normal(k_x, (B, M), dtype=jnp.float32)

    logits = jax.block_until_ready(trainable_ensemble_forward(raw_weights, model_outputs))
    ref = jnp.sum(jax.nn.softmax(raw_weights) * model_outputs, axis=1)
    assert logits.shape == (B,)
    assert jnp.allclose(logits, ref, atol=1e-5, rtol=1e-5)

    # Non-uniform weights, tiny batch (single padded row block).
    B2 = 8
    raw_w2 = jax.random.normal(k_w, (M,), dtype=jnp.float32)
    mo2 = jax.random.normal(k_x2, (B2, M), dtype=jnp.float32)
    out2 = jax.block_until_ready(trainable_ensemble_forward(raw_w2, mo2))
    ref2 = jnp.sum(jax.nn.softmax(raw_w2) * mo2, axis=1)
    assert out2.shape == (B2,)
    assert jnp.allclose(out2, ref2, atol=1e-5, rtol=1e-5)

    # Aligned batch: fully copy-free path (no pad), 2 grid steps.
    B3 = 4096
    mo3 = jax.random.normal(k_x3, (B3, M), dtype=jnp.float32)
    out3 = jax.block_until_ready(trainable_ensemble_forward(raw_w2, mo3))
    ref3 = jnp.sum(jax.nn.softmax(raw_w2) * mo3, axis=1)
    assert out3.shape == (B3,)
    assert jnp.allclose(out3, ref3, atol=1e-5, rtol=1e-5)

    print("KERNEL_OK")
</pallas_src>

<mosaic_0001>
module attributes {stable_mosaic.version = 11 : i64} {
  func.func @ensemble_kernel(%arg0: i32, %arg1: memref<16x128xf32, #tpu.memory_space<vmem>>, %arg2: memref<128x32xf32, #tpu.memory_space<vmem>>, %arg3: memref<16x32xf32, #tpu.memory_space<vmem>>) attributes {dimension_semantics = [#tpu.dimension_semantics<parallel>], iteration_bounds = array<i64: 2>, scalar_prefetch = 0 : i64, scratch_operands = 0 : i64, tpu.core_type = #tpu.core_type<tc>, window_params = [{transform_indices = @transform_0, window_bounds = array<i64: 16, 128>}, {pipeline_mode = #tpu.pipeline_mode<synchronous>, transform_indices = @transform_1, window_bounds = array<i64: 128, 32>}, {transform_indices = @transform_2, window_bounds = array<i64: 16, 32>}]} {
    %c0 = arith.constant 0 : index
    %c0_0 = arith.constant 0 : index
    %0 = vector.load %arg1[%c0, %c0_0] : memref<16x128xf32, #tpu.memory_space<vmem>>, vector<16x128xf32>
    %c0_1 = arith.constant 0 : index
    %c0_2 = arith.constant 0 : index
    %1 = vector.load %arg2[%c0_1, %c0_2] : memref<128x32xf32, #tpu.memory_space<vmem>>, vector<128x32xf32>
    %cst = arith.constant dense<0.000000e+00> : vector<16x32xf32>
    %2 = tpu.matmul %0, %1, %cst {dimension_numbers = #tpu.dot_dimension_numbers<[1], [0], [0], [1], [0, 0, 1, 1], [], []>, precision = #tpu.contract_precision<fp32>} : vector<16x128xf32>, vector<128x32xf32>, vector<16x32xf32> -> vector<16x32xf32>
    %c0_3 = arith.constant 0 : index
    %c0_4 = arith.constant 0 : index
    %3 = vector.load %arg3[%c0_3, %c0_4] : memref<16x32xf32, #tpu.memory_space<vmem>>, vector<16x32xf32>
    tpu.vector_store %arg3[%c0_3, %c0_4], %2 {strides = array<i32>} : memref<16x32xf32, #tpu.memory_space<vmem>>, vector<16x32xf32>,
    return
  }
  func.func @transform_0(%arg0: i32) -> (i32, i32) {
    %c0_i32 = arith.constant 0 : i32
    %c0_i32_0 = arith.constant 0 : i32
    return %arg0, %c0_i32 : i32, i32
  }
  func.func @transform_1(%arg0: i32) -> (i32, i32) {
    %c0_i32 = arith.constant 0 : i32
    %c0_i32_0 = arith.constant 0 : i32
    %c0_i32_1 = arith.constant 0 : i32
    return %c0_i32, %c0_i32_0 : i32, i32
  }
  func.func @transform_2(%arg0: i32) -> (i32, i32) {
    %c0_i32 = arith.constant 0 : i32
    %c0_i32_0 = arith.constant 0 : i32
    return %arg0, %c0_i32 : i32, i32
  }
}

</mosaic_0001>

<llo_original>
// kernel: tpu_custom_call.1
$region0: #{tpu_custom_call.1}
  #allocation0 [shape = 'u32[]', space=smem, size = 0x4, offset = 0x4, fixed_abs, tag = 'smem constant byte address 0x4 - core index']
  #allocation1 [shape = 'u32[72,128]{1,0:T(1,128)}', space=vmem, size = 0x9000, scoped, tag = 'internal scratch']
  %s0 = inlined_call_operand.vmem [shape: f32[32,128], index: 0, kind: input, shape index: {}]
  %s1 = inlined_call_operand.vmem [shape: f32[128,32], index: 1, kind: input, shape index: {}]
  %s2 = inlined_call_operand.hbm [shape: f32[32,32], index: 2, kind: output, shape index: {}]
  %s3 = sld [smem:[#allocation0]]
  $region41: #{tpu_custom_call.1} parent=0
    _
  %s5 = ssub.s32 1, %s3
  %s6 = scalar_select 0, %s5, %s3
  $region1: #{tpu_custom_call.1} parent=0
    #allocation2 [shape = 'u8[16384]{0}', space=vmem, size = 0x4000, scoped, tag = 'output window, operand 0']
    #allocation3 [shape = 's32[2]{0}', space=sflag, size = 0x8, scoped, tag = 'scoped memory for tpu_custom_call.1']
    %7 = vsyncpa [#allocation3], 0
    %s8 = scalar_lea.sflag [#allocation3], 1
    %9 = vsyncpa %s8, 0
    loop: start=0, step=1, limit=4
    $region2: #{tpu_custom_call.1} parent=1 // loop_pre_header
      _
    $region3: #{tpu_custom_call.1} parent=1 // loop_header
      %s11 = sphi 0, %s15
      %p12 = scmp.ge.s32.totalorder %s11, 4
      %s21 = sphi 0, %s23
      %s24 = sphi 0, %s21
      %s25 = sphi 0, %s24
      %s41 = sphi 0, %s25
      %s45 = sphi 0, %s45
      %s47 = sphi 0, %s45
      %s48 = sphi 0, %s47
      %s62 = sphi 0, %s48
      %s68 = sphi 0, %s70
      %s71 = sphi 0, %s68
      %s72 = sphi 0, %s71
      %s88 = sphi 0, %s72
    $region4: #{tpu_custom_call.1} parent=1 // loop_header_branch
      %14 = sbr.rel (%p12) target = $region8
    $region5: #{tpu_custom_call.1} parent=1 // loop_body
      %s16 = ssub.s32 %s11, 1
      %s17 = ssub.s32 %s11, 2
      %s18 = sadd.s32 %s11, 1
      %s19 = ssub.s32 %s11, %s18
      %p20 = scmp.eq.s32.totalorder %s19, 0
      %s22 = sadd.s32 %s21, 1
      %s23 = scalar_select %p20, %s21, %s22
      %p26 = pneg %p20
      %p27 = scmp.eq.s32.totalorder %s11, 1
      %p28 = por %p26, %p27
      %p29 = scmp.ne.s32.totalorder %s21, %s24
      %p30 = scmp.eq.s32.totalorder %s11, 0
      %p31 = por %p29, %p30
      %p32 = scmp.ne.s32.totalorder %s21, %s24
      %p33 = scmp.eq.s32.totalorder %s16, 1
      %p34 = por %p32, %p33
      %p35 = scmp.ne.s32.totalorder %s24, %s25
      %p36 = scmp.eq.s32.totalorder %s16, 0
      %p37 = por %p35, %p36
      %p38 = scmp.ne.s32.totalorder %s24, %s25
      %p39 = scmp.eq.s32.totalorder %s17, 1
      %p40 = por %p38, %p39
      %p42 = scmp.ne.s32.totalorder %s25, %s41
      %p43 = scmp.eq.s32.totalorder %s17, 0
      %p44 = por %p42, %p43
      %s46 = sadd.s32 %s45, 1
      %p49 = scmp.eq.s32.totalorder %s11, 1
      %p50 = scmp.ne.s32.totalorder %s45, %s47
      %p51 = scmp.eq.s32.totalorder %s11, 0
      %p52 = por %p50, %p51
      %p53 = scmp.ne.s32.totalorder %s45, %s47
      %p54 = scmp.eq.s32.totalorder %s16, 1
      %p55 = por %p53, %p54
      %p56 = scmp.ne.s32.totalorder %s47, %s48
      %p57 = scmp.eq.s32.totalorder %s16, 0
      %p58 = por %p56, %p57
      %p59 = scmp.ne.s32.totalorder %s47, %s48
      %p60 = scmp.eq.s32.totalorder %s17, 1
      %p61 = por %p59, %p60
      %p63 = scmp.ne.s32.totalorder %s48, %s62
      %p64 = scmp.eq.s32.totalorder %s17, 0
      %p65 = por %p63, %p64
      %s66 = ssub.s32 %s11, %s18
      %p67 = scmp.eq.s32.totalorder %s66, 0
      %s69 = sadd.s32 %s68, 1
      %s70 = scalar_select %p67, %s68, %s69
      %p73 = pneg %p67
      %p74 = scmp.eq.s32.totalorder %s11, 1
      %p75 = por %p73, %p74
      %p76 = scmp.ne.s32.totalorder %s68, %s71
      %p77 = scmp.eq.s32.totalorder %s11, 0
      %p78 = por %p76, %p77
      %p79 = scmp.ne.s32.totalorder %s68, %s71
      %p80 = scmp.eq.s32.totalorder %s16, 1
      %p81 = por %p79, %p80
      %p82 = scmp.ne.s32.totalorder %s71, %s72
      %p83 = scmp.eq.s32.totalorder %s16, 0
      %p84 = por %p82, %p83
      %p85 = scmp.ne.s32.totalorder %s71, %s72
      %p86 = scmp.eq.s32.totalorder %s17, 1
      %p87 = por %p85, %p86
      %p89 = scmp.ne.s32.totalorder %s72, %s88
      %p90 = scmp.eq.s32.totalorder %s17, 0
      %p91 = por %p89, %p90
      %p92 = scmp.le.s32.totalorder 1, %s11
      %p93 = scmp.lt.s32.totalorder %s11, 3
      %p94 = pnand %p92, %p93
      %p95 = pneg %p94
      // Predicated region
      $region9: #{tpu_custom_call.1} parent=5 // pred_check
        _
      $region10: #{tpu_custom_call.1} parent=5 // pred_check_branch
        %97 = sbr.rel (%p94) target = $region12
      $region11: #{tpu_custom_call.1} parent=5 // pred_region
        %s98 = ssub.s32 %s11, 1
        // Predicated region
        $region13: #{tpu_custom_call.1} parent=11 // pred_check
          %p99 = pneg %p58
        $region14: #{tpu_custom_call.1} parent=11 // pred_check_branch
          %101 = sbr.rel (%p99) target = $region16
        $region15: #{tpu_custom_call.1} parent=11 // pred_region
          _
        $region16: #{tpu_custom_call.1} parent=11 // pred_fallthru
          _
      $region12: #{tpu_custom_call.1} parent=5 // pred_fallthru
        _
      %p102 = scmp.lt.s32.totalorder %s11, 2
      // Predicated region
      $region17: #{tpu_custom_call.1} parent=5 // pred_check
        %p103 = pneg %p102
      $region18: #{tpu_custom_call.1} parent=5 // pred_check_branch
        %105 = sbr.rel (%p103) target = $region20
      $region19: #{tpu_custom_call.1} parent=5 // pred_region
        // Predicated region
        $region21: #{tpu_custom_call.1} parent=19 // pred_check
          %p106 = pneg %p31
        $region22: #{tpu_custom_call.1} parent=19 // pred_check_branch
          %108 = sbr.rel (%p106) target = $region24
        $region23: #{tpu_custom_call.1} parent=19 // pred_region
          %s109 = smul.u32 2, %s11
          %p110 = scmp.lt.s32.totalorder %s109, 3
          %s111 = scalar_select %p110, %s109, 3
          %s112 = smul.addr %s111, 8
          %s113 = scalar_lea.vmem %s0, %s112
          %s114 = smul.u32 2, %s11
        $region24: #{tpu_custom_call.1} parent=19 // pred_fallthru
          _
      $region20: #{tpu_custom_call.1} parent=5 // pred_fallthru
        _
      %p115 = scmp.le.s32.totalorder 1, %s11
      %p116 = scmp.lt.s32.totalorder %s11, 3
      %p117 = pnand %p115, %p116
      %p118 = pneg %p117
      // Predicated region
      $region25: #{tpu_custom_call.1} parent=5 // pred_check
        _
      $region26: #{tpu_custom_call.1} parent=5 // pred_check_branch
        %120 = sbr.rel (%p117) target = $region28
      $region27: #{tpu_custom_call.1} parent=5 // pred_region
        %s121 = ssub.s32 %s11, 1
        %s122 = smul.u32 2, %s16
        %p123 = scmp.lt.s32.totalorder %s122, 3
        %s124 = scalar_select %p123, %s122, 3
        %s125 = smul.addr %s124, 8
        %s126 = scalar_lea.vmem %s0, %s125
        %p127 = pneg %p37
        %p128 = pneg %p34
        %p129 = pneg %p58
        %p130 = pneg %p55
        %p131 = pneg %p84
        %p132 = pneg %p81
        %s133 = sand.u32 %s71, 1
        %s134 = scalar_lea.sflag [#allocation3], %s133
        %s135 = sand.u32 %s71, 1
        %s136 = smul.addr %s135, 16
        %s137 = scalar_lea.vmem [#allocation2], %s136
        %s138 = smul.u32 2, %s16
        %p139 = scmp.lt.s32.totalorder %s138, 3
        %s140 = scalar_select %p139, %s138, 3
        %s141 = smul.addr %s140, 8
        %s142 = scalar_lea.vmem %s0, %s141
        %s143 = smul.u32 2, %s16
        %s144 = smul.u32 2, %s16
        %v145 = vld [vmem:[%s142] sm:$0xff]
        %v146 = vld [vmem:[%s142 + $0x8] sm:$0xff]
        %v147 = vld [vmem:[%s1] sm:$0xff]
        %v148 = vld [vmem:[%s1 + $0x8] sm:$0xff]
        %v149 = vld [vmem:[%s1 + $0x10] sm:$0xff]
        %v150 = vld [vmem:[%s1 + $0x18] sm:$0xff]
        %v151 = vld [vmem:[%s1 + $0x20] sm:$0xff]
        %v152 = vld [vmem:[%s1 + $0x28] sm:$0xff]
        %v153 = vld [vmem:[%s1 + $0x30] sm:$0xff]
        %v154 = vld [vmem:[%s1 + $0x38] sm:$0xff]
        %v155 = vld [vmem:[%s1 + $0x40] sm:$0xff]
        %v156 = vld [vmem:[%s1 + $0x48] sm:$0xff]
        %v157 = vld [vmem:[%s1 + $0x50] sm:$0xff]
        %v158 = vld [vmem:[%s1 + $0x58] sm:$0xff]
        %v159 = vld [vmem:[%s1 + $0x60] sm:$0xff]
        %v160 = vld [vmem:[%s1 + $0x68] sm:$0xff]
        %v161 = vld [vmem:[%s1 + $0x70] sm:$0xff]
        %v162 = vld [vmem:[%s1 + $0x78] sm:$0xff]
        %v163 = vand.u32 %v162, 4294901760
        %164 = vmatpush.msra.mxu0 %v163
        %v165 = vand.u32 %v161, 4294901760
        %166 = vmatpush.msra.mxu0 %v165
        %v167 = vand.u32 %v160, 4294901760
        %168 = vmatpush.msra.mxu0 %v167
        %v169 = vand.u32 %v159, 4294901760
        %170 = vmatpush.msra.mxu0 %v169
        %v171 = vand.u32 %v158, 4294901760
        %172 = vmatpush.msra.mxu0 %v171
        %v173 = vand.u32 %v157, 4294901760
        %174 = vmatpush.msra.mxu0 %v173
        %v175 = vand.u32 %v156, 4294901760
        %176 = vmatpush.msra.mxu0 %v175
        %v177 = vand.u32 %v155, 4294901760
        %178 = vmatpush.msra.mxu0 %v177
        %v179 = vand.u32 %v154, 4294901760
        %180 = vmatpush.msra.mxu0 %v179
        %v181 = vand.u32 %v153, 4294901760
        %182 = vmatpush.msra.mxu0 %v181
        %v183 = vand.u32 %v152, 4294901760
        %184 = vmatpush.msra.mxu0 %v183
        %v185 = vand.u32 %v151, 4294901760
        %186 = vmatpush.msra.mxu0 %v185
        %v187 = vand.u32 %v150, 4294901760
        %188 = vmatpush.msra.mxu0 %v187
        %v189 = vand.u32 %v149, 4294901760
        %190 = vmatpush.msra.mxu0 %v189
        %v191 = vand.u32 %v148, 4294901760
        %192 = vmatpush.msra.mxu0 %v191
        %v193 = vand.u32 %v147, 4294901760
        %194 = vmatpush.msra.mxu0 %v193
        %v195 = vand.u32 %v145, 4294901760
        %v196 = vsub.f32 %v145, %v195
        %v197 = vand.u32 %v196, 4294901760
        %v198 = vsub.f32 %v196, %v197
        %v199 = vand.u32 %v198, 4294901760
        %200 = vmatmul.f32.gmra.mxu0 %v199
        %v201 = vpop.f32.mrf.mxu0
        %v202 = vadd.f32 0.0, %v201
        %v203 = vand.u32 %v146, 4294901760
        %v204 = vsub.f32 %v146, %v203
        %v205 = vand.u32 %v204, 4294901760
        %v206 = vsub.f32 %v204, %v205
        %v207 = vand.u32 %v206, 4294901760
        %208 = vmatmul.f32.gmra.mxu0 %v207
        %v209 = vpop.f32.mrf.mxu0
        %v210 = vadd.f32 0.0, %v209
        %211 = vdwg.mxu0
        %v212 = vand.u32 %v162, 4294901760
        %v213 = vsub.f32 %v162, %v212
        %v214 = vand.u32 %v213, 4294901760
        %v215 = vsub.f32 %v213, %v214
        %v216 = vand.u32 %v215, 4294901760
        %217 = vmatpush.msra.mxu0 %v216
        %v218 = vand.u32 %v161, 4294901760
        %v219 = vsub.f32 %v161, %v218
        %v220 = vand.u32 %v219, 4294901760
        %v221 = vsub.f32 %v219, %v220
        %v222 = vand.u32 %v221, 4294901760
        %223 = vmatpush.msra.mxu0 %v222
        %v224 = vand.u32 %v160, 4294901760
        %v225 = vsub.f32 %v160, %v224
        %v226 = vand.u32 %v225, 4294901760
        %v227 = vsub.f32 %v225, %v226
        %v228 = vand.u32 %v227, 4294901760
        %229 = vmatpush.msra.mxu0 %v228
        %v230 = vand.u32 %v159, 4294901760
        %v231 = vsub.f32 %v159, %v230
        %v232 = vand.u32 %v231, 4294901760
        %v233 = vsub.f32 %v231, %v232
        %v234 = vand.u32 %v233, 4294901760
        %235 = vmatpush.msra.mxu0 %v234
        %v236 = vand.u32 %v158, 4294901760
        %v237 = vsub.f32 %v158, %v236
        %v238 = vand.u32 %v237, 4294901760
        %v239 = vsub.f32 %v237, %v238
        %v240 = vand.u32 %v239, 4294901760
        %241 = vmatpush.msra.mxu0 %v240
        %v242 = vand.u32 %v157, 4294901760
        %v243 = vsub.f32 %v157, %v242
        %v244 = vand.u32 %v243, 4294901760
        %v245 = vsub.f32 %v243, %v244
        %v246 = vand.u32 %v245, 4294901760
        %247 = vmatpush.msra.mxu0 %v246
        %v248 = vand.u32 %v156, 4294901760
        %v249 = vsub.f32 %v156, %v248
        %v250 = vand.u32 %v249, 4294901760
        %v251 = vsub.f32 %v249, %v250
        %v252 = vand.u32 %v251, 4294901760
        %253 = vmatpush.msra.mxu0 %v252
        %v254 = vand.u32 %v155, 4294901760
        %v255 = vsub.f32 %v155, %v254
        %v256 = vand.u32 %v255, 4294901760
        %v257 = vsub.f32 %v255, %v256
        %v258 = vand.u32 %v257, 4294901760
        %259 = vmatpush.msra.mxu0 %v258
        %v260 = vand.u32 %v154, 4294901760
        %v261 = vsub.f32 %v154, %v260
        %v262 = vand.u32 %v261, 4294901760
        %v263 = vsub.f32 %v261, %v262
        %v264 = vand.u32 %v263, 4294901760
        %265 = vmatpush.msra.mxu0 %v264
        %v266 = vand.u32 %v153, 4294901760
        %v267 = vsub.f32 %v153, %v266
        %v268 = vand.u32 %v267, 4294901760
        %v269 = vsub.f32 %v267, %v268
        %v270 = vand.u32 %v269, 4294901760
        %271 = vmatpush.msra.mxu0 %v270
        %v272 = vand.u32 %v152, 4294901760
        %v273 = vsub.f32 %v152, %v272
        %v274 = vand.u32 %v273, 4294901760
        %v275 = vsub.f32 %v273, %v274
        %v276 = vand.u32 %v275, 4294901760
        %277 = vmatpush.msra.mxu0 %v276
        %v278 = vand.u32 %v151, 4294901760
        %v279 = vsub.f32 %v151, %v278
        %v280 = vand.u32 %v279, 4294901760
        %v281 = vsub.f32 %v279, %v280
        %v282 = vand.u32 %v281, 4294901760
        %283 = vmatpush.msra.mxu0 %v282
        %v284 = vand.u32 %v150, 4294901760
        %v285 = vsub.f32 %v150, %v284
        %v286 = vand.u32 %v285, 4294901760
        %v287 = vsub.f32 %v285, %v286
        %v288 = vand.u32 %v287, 4294901760
        %289 = vmatpush.msra.mxu0 %v288
        %v290 = vand.u32 %v149, 4294901760
        %v291 = vsub.f32 %v149, %v290
        %v292 = vand.u32 %v291, 4294901760
        %v293 = vsub.f32 %v291, %v292
        %v294 = vand.u32 %v293, 4294901760
        %295 = vmatpush.msra.mxu0 %v294
        %v296 = vand.u32 %v148, 4294901760
        %v297 = vsub.f32 %v148, %v296
        %v298 = vand.u32 %v297, 4294901760
        %v299 = vsub.f32 %v297, %v298
        %v300 = vand.u32 %v299, 4294901760
        %301 = vmatpush.msra.mxu0 %v300
        %v302 = vand.u32 %v147, 4294901760
        %v303 = vsub.f32 %v147, %v302
        %v304 = vand.u32 %v303, 4294901760
        %v305 = vsub.f32 %v303, %v304
        %v306 = vand.u32 %v305, 4294901760
        %307 = vmatpush.msra.mxu0 %v306
        %v308 = vand.u32 %v145, 4294901760
        %309 = vmatmul.f32.gmra.mxu0 %v308
        %v310 = vpop.f32.mrf.mxu0
        %v311 = vadd.f32 %v202, %v310
        %v312 = vand.u32 %v146, 4294901760
        %313 = vmatmul.f32.gmra.mxu0 %v312
        %v314 = vpop.f32.mrf.mxu0
        %v315 = vadd.f32 %v210, %v314
        %316 = vdwg.mxu0
        %v317 = vand.u32 %v162, 4294901760
        %v318 = vsub.f32 %v162, %v317
        %319 = vmatpush.msra.mxu0 %v318
        %v320 = vand.u32 %v161, 4294901760
        %v321 = vsub.f32 %v161, %v320
        %322 = vmatpush.msra.mxu0 %v321
        %v323 = vand.u32 %v160, 4294901760
        %v324 = vsub.f32 %v160, %v323
        %325 = vmatpush.msra.mxu0 %v324
        %v326 = vand.u32 %v159, 4294901760
        %v327 = vsub.f32 %v159, %v326
        %328 = vmatpush.msra.mxu0 %v327
        %v329 = vand.u32 %v158, 4294901760
        %v330 = vsub.f32 %v158, %v329
        %331 = vmatpush.msra.mxu0 %v330
        %v332 = vand.u32 %v157, 4294901760
        %v333 = vsub.f32 %v157, %v332
        %334 = vmatpush.msra.mxu0 %v333
        %v335 = vand.u32 %v156, 4294901760
        %v336 = vsub.f32 %v156, %v335
        %337 = vmatpush.msra.mxu0 %v336
        %v338 = vand.u32 %v155, 4294901760
        %v339 = vsub.f32 %v155, %v338
        %340 = vmatpush.msra.mxu0 %v339
        %v341 = vand.u32 %v154, 4294901760
        %v342 = vsub.f32 %v154, %v341
        %343 = vmatpush.msra.mxu0 %v342
        %v344 = vand.u32 %v153, 4294901760
        %v345 = vsub.f32 %v153, %v344
        %346 = vmatpush.msra.mxu0 %v345
        %v347 = vand.u32 %v152, 4294901760
        %v348 = vsub.f32 %v152, %v347
        %349 = vmatpush.msra.mxu0 %v348
        %v350 = vand.u32 %v151, 4294901760
        %v351 = vsub.f32 %v151, %v350
        %352 = vmatpush.msra.mxu0 %v351
        %v353 = vand.u32 %v150, 4294901760
        %v354 = vsub.f32 %v150, %v353
        %355 = vmatpush.msra.mxu0 %v354
        %v356 = vand.u32 %v149, 4294901760
        %v357 = vsub.f32 %v149, %v356
        %358 = vmatpush.msra.mxu0 %v357
        %v359 = vand.u32 %v148, 4294901760
        %v360 = vsub.f32 %v148, %v359
        %361 = vmatpush.msra.mxu0 %v360
        %v362 = vand.u32 %v147, 4294901760
        %v363 = vsub.f32 %v147, %v362
        %364 = vmatpush.msra.mxu0 %v363
        %v365 = vand.u32 %v145, 4294901760
        %v366 = vsub.f32 %v145, %v365
        %367 = vmatmul.f32.gmra.mxu0 %v366
        %v368 = vpop.f32.mrf.mxu0
        %v369 = vadd.f32 %v311, %v368
        %v370 = vand.u32 %v146, 4294901760
        %v371 = vsub.f32 %v146, %v370
        %372 = vmatmul.f32.gmra.mxu0 %v371
        %v373 = vpop.f32.mrf.mxu0
        %v374 = vadd.f32 %v315, %v373
        %375 = vdwg.mxu0
        %v376 = vand.u32 %v162, 4294901760
        %377 = vmatpush.msra.mxu0 %v376
        %v378 = vand.u32 %v161, 4294901760
        %379 = vmatpush.msra.mxu0 %v378
        %v380 = vand.u32 %v160, 4294901760
        %381 = vmatpush.msra.mxu0 %v380
        %v382 = vand.u32 %v159, 4294901760
        %383 = vmatpush.msra.mxu0 %v382
        %v384 = vand.u32 %v158, 4294901760
        %385 = vmatpush.msra.mxu0 %v384
        %v386 = vand.u32 %v157, 4294901760
        %387 = vmatpush.msra.mxu0 %v386
        %v388 = vand.u32 %v156, 4294901760
        %389 = vmatpush.msra.mxu0 %v388
        %v390 = vand.u32 %v155, 4294901760
        %391 = vmatpush.msra.mxu0 %v390
        %v392 = vand.u32 %v154, 4294901760
        %393 = vmatpush.msra.mxu0 %v392
        %v394 = vand.u32 %v153, 4294901760
        %395 = vmatpush.msra.mxu0 %v394
        %v396 = vand.u32 %v152, 4294901760
        %397 = vmatpush.msra.mxu0 %v396
        %v398 = vand.u32 %v151, 4294901760
        %399 = vmatpush.msra.mxu0 %v398
        %v400 = vand.u32 %v150, 4294901760
        %401 = vmatpush.msra.mxu0 %v400
        %v402 = vand.u32 %v149, 4294901760
        %403 = vmatpush.msra.mxu0 %v402
        %v404 = vand.u32 %v148, 4294901760
        %405 = vmatpush.msra.mxu0 %v404
        %v406 = vand.u32 %v147, 4294901760
        %407 = vmatpush.msra.mxu0 %v406
        %v408 = vand.u32 %v145, 4294901760
        %v409 = vsub.f32 %v145, %v408
        %v410 = vand.u32 %v409, 4294901760
        %411 = vmatmul.f32.gmra.mxu0 %v410
        %v412 = vpop.f32.mrf.mxu0
        %v413 = vadd.f32 %v369, %v412
        %v414 = vand.u32 %v146, 4294901760
        %v415 = vsub.f32 %v146, %v414
        %v416 = vand.u32 %v415, 4294901760
        %417 = vmatmul.f32.gmra.mxu0 %v416
        %v418 = vpop.f32.mrf.mxu0
        %v419 = vadd.f32 %v374, %v418
        %420 = vdwg.mxu0
        %v421 = vand.u32 %v162, 4294901760
        %v422 = vsub.f32 %v162, %v421
        %v423 = vand.u32 %v422, 4294901760
        %424 = vmatpush.msra.mxu0 %v423
        %v425 = vand.u32 %v161, 4294901760
        %v426 = vsub.f32 %v161, %v425
        %v427 = vand.u32 %v426, 4294901760
        %428 = vmatpush.msra.mxu0 %v427
        %v429 = vand.u32 %v160, 4294901760
        %v430 = vsub.f32 %v160, %v429
        %v431 = vand.u32 %v430, 4294901760
        %432 = vmatpush.msra.mxu0 %v431
        %v433 = vand.u32 %v159, 4294901760
        %v434 = vsub.f32 %v159, %v433
        %v435 = vand.u32 %v434, 4294901760
        %436 = vmatpush.msra.mxu0 %v435
        %v437 = vand.u32 %v158, 4294901760
        %v438 = vsub.f32 %v158, %v437
        %v439 = vand.u32 %v438, 4294901760
        %440 = vmatpush.msra.mxu0 %v439
        %v441 = vand.u32 %v157, 4294901760
        %v442 = vsub.f32 %v157, %v441
        %v443 = vand.u32 %v442, 4294901760
        %444 = vmatpush.msra.mxu0 %v443
        %v445 = vand.u32 %v156, 4294901760
        %v446 = vsub.f32 %v156, %v445
        %v447 = vand.u32 %v446, 4294901760
        %448 = vmatpush.msra.mxu0 %v447
        %v449 = vand.u32 %v155, 4294901760
        %v450 = vsub.f32 %v155, %v449
        %v451 = vand.u32 %v450, 4294901760
        %452 = vmatpush.msra.mxu0 %v451
        %v453 = vand.u32 %v154, 4294901760
        %v454 = vsub.f32 %v154, %v453
        %v455 = vand.u32 %v454, 4294901760
        %456 = vmatpush.msra.mxu0 %v455
        %v457 = vand.u32 %v153, 4294901760
        %v458 = vsub.f32 %v153, %v457
        %v459 = vand.u32 %v458, 4294901760
        %460 = vmatpush.msra.mxu0 %v459
        %v461 = vand.u32 %v152, 4294901760
        %v462 = vsub.f32 %v152, %v461
        %v463 = vand.u32 %v462, 4294901760
        %464 = vmatpush.msra.mxu0 %v463
        %v465 = vand.u32 %v151, 4294901760
        %v466 = vsub.f32 %v151, %v465
        %v467 = vand.u32 %v466, 4294901760
        %468 = vmatpush.msra.mxu0 %v467
        %v469 = vand.u32 %v150, 4294901760
        %v470 = vsub.f32 %v150, %v469
        %v471 = vand.u32 %v470, 4294901760
        %472 = vmatpush.msra.mxu0 %v471
        %v473 = vand.u32 %v149, 4294901760
        %v474 = vsub.f32 %v149, %v473
        %v475 = vand.u32 %v474, 4294901760
        %476 = vmatpush.msra.mxu0 %v475
        %v477 = vand.u32 %v148, 4294901760
        %v478 = vsub.f32 %v148, %v477
        %v479 = vand.u32 %v478, 4294901760
        %480 = vmatpush.msra.mxu0 %v479
        %v481 = vand.u32 %v147, 4294901760
        %v482 = vsub.f32 %v147, %v481
        %v483 = vand.u32 %v482, 4294901760
        %484 = vmatpush.msra.mxu0 %v483
        %v485 = vand.u32 %v145, 4294901760
        %486 = vmatmul.f32.gmra.mxu0 %v485
        %v487 = vpop.f32.mrf.mxu0
        %v488 = vadd.f32 %v413, %v487
        %v489 = vand.u32 %v146, 4294901760
        %490 = vmatmul.f32.gmra.mxu0 %v489
        %v491 = vpop.f32.mrf.mxu0
        %v492 = vadd.f32 %v419, %v491
        %493 = vdwg.mxu0
        %v494 = vand.u32 %v162, 4294901760
        %495 = vmatpush.msra.mxu0 %v494
        %v496 = vand.u32 %v161, 4294901760
        %497 = vmatpush.msra.mxu0 %v496
        %v498 = vand.u32 %v160, 4294901760
        %499 = vmatpush.msra.mxu0 %v498
        %v500 = vand.u32 %v159, 4294901760
        %501 = vmatpush.msra.mxu0 %v500
        %v502 = vand.u32 %v158, 4294901760
        %503 = vmatpush.msra.mxu0 %v502
        %v504 = vand.u32 %v157, 4294901760
        %505 = vmatpush.msra.mxu0 %v504
        %v506 = vand.u32 %v156, 4294901760
        %507 = vmatpush.msra.mxu0 %v506
        %v508 = vand.u32 %v155, 4294901760
        %509 = vmatpush.msra.mxu0 %v508
        %v510 = vand.u32 %v154, 4294901760
        %511 = vmatpush.msra.mxu0 %v510
        %v512 = vand.u32 %v153, 4294901760
        %513 = vmatpush.msra.mxu0 %v512
        %v514 = vand.u32 %v152, 4294901760
        %515 = vmatpush.msra.mxu0 %v514
        %v516 = vand.u32 %v151, 4294901760
        %517 = vmatpush.msra.mxu0 %v516
        %v518 = vand.u32 %v150, 4294901760
        %519 = vmatpush.msra.mxu0 %v518
        %v520 = vand.u32 %v149, 4294901760
        %521 = vmatpush.msra.mxu0 %v520
        %v522 = vand.u32 %v148, 4294901760
        %523 = vmatpush.msra.mxu0 %v522
        %v524 = vand.u32 %v147, 4294901760
        %525 = vmatpush.msra.mxu0 %v524
        %v526 = vand.u32 %v145, 4294901760
        %527 = vmatmul.f32.gmra.mxu0 %v526
        %v528 = vpop.f32.mrf.mxu0
        %v529 = vadd.f32 %v488, %v528
        %v530 = vand.u32 %v146, 4294901760
        %531 = vmatmul.f32.gmra.mxu0 %v530
        %v532 = vpop.f32.mrf.mxu0
        %v533 = vadd.f32 %v492, %v532
        %534 = vdwg.mxu0
        %vm535 = vcmask 261120
        %536 = vst.msk [vmem:[%s137] sm:$0xff] %vm535, %v529
        %537 = vst.msk [vmem:[%s137 + $0x8] sm:$0xff] %vm535, %v533
        %s538 = sand.u32 %s71, 1
        %s539 = scalar_lea.sflag [#allocation3], %s538
        %s540 = sand.u32 %s71, 1
        %s541 = smul.addr %s540, 16
        %s542 = scalar_lea.vmem [#allocation2], %s541
        // Predicated region
        $region29: #{tpu_custom_call.1} parent=27 // pred_check
          %p543 = pneg %p81
        $region30: #{tpu_custom_call.1} parent=27 // pred_check_branch
          %545 = sbr.rel (%p543) target = $region32
        $region31: #{tpu_custom_call.1} parent=27 // pred_region
          %s546 = smul.u32 2, %s16
          %548 = vsyncadd %s539, 0
          %s549 = smul.addr %s546, 8
          %s550 = scalar_lea.hbm %s2, %s549
          %s551 = sshll.u32 %s542, 4
          %s552 = int_to_ptr.vmem [resolvable:$true] %s551
          %s553 = sshll.u32 %s550, 4
          %s554 = int_to_ptr.hbm [resolvable:$true] %s553
          %559 = dma.vmem_to_hbm [thread:$0]  %s552, 256, %s554, %s539, 128, 128, 8
        $region32: #{tpu_custom_call.1} parent=27 // pred_fallthru
          _
      $region28: #{tpu_custom_call.1} parent=5 // pred_fallthru
        _
      %p560 = scmp.le.s32.totalorder 2, %s11
      // Predicated region
      $region33: #{tpu_custom_call.1} parent=5 // pred_check
        %p561 = pneg %p560
      $region34: #{tpu_custom_call.1} parent=5 // pred_check_branch
        %563 = sbr.rel (%p561) target = $region36
      $region35: #{tpu_custom_call.1} parent=5 // pred_region
        %s564 = ssub.s32 %s11, 2
        // Predicated region
        $region37: #{tpu_custom_call.1} parent=35 // pred_check
          %p565 = pneg %p87
        $region38: #{tpu_custom_call.1} parent=35 // pred_check_branch
          %567 = sbr.rel (%p565) target = $region40
        $region39: #{tpu_custom_call.1} parent=35 // pred_region
          %s568 = sand.u32 %s72, 1
          %s569 = scalar_lea.sflag [#allocation3], %s568
          %s570 = sand.u32 %s72, 1
          %s571 = smul.addr %s570, 16
          %s572 = scalar_lea.vmem [#allocation2], %s571
          %574 = dma.done %s569, 256
        $region40: #{tpu_custom_call.1} parent=35 // pred_fallthru
          _
      $region36: #{tpu_custom_call.1} parent=5 // pred_fallthru
        _
    $region6: #{tpu_custom_call.1} parent=1 // loop_footer
      %s15 = sadd.s32 1, %s11
    $region7: #{tpu_custom_call.1} parent=1 // loop_footer_branch
      %10 = sbr.rel target = $region3
    $region8: #{tpu_custom_call.1} parent=1 // loop_exit
      _
    %575 = vsyncpa [#allocation3], 1
    %s576 = scalar_lea.sflag [#allocation3], 1
    %577 = vsyncpa %s576, 1

</llo_original>
